<compile_context>
chip_gen: v7x
topology: tpu7x:2x2x1
jax: 0.10.0
libtpu: 0.0.40
codegen_flags: <defaults>
</compile_context>

<pallas_src>
import jax
import jax.numpy as jnp
from jax.experimental import pallas as pl
from jax.experimental.pallas import tpu as pltpu

KH = KW = 3   # conv kernel size
PAD = 1       # 'same' padding for 3x3


def _make_kernel(B, C_in, H, W):
    HW = H * W

    def kernel(x_ref, m_ref, w_ref, o_ref):
        # x_ref: (B*C_in, HW)                    flattened NCHW input, batch folded
        # m_ref: (KH*KW, HW)                     precomputed zero-padding halo masks
        # w_ref: (B*C_out, KH*KW*B*C_in + 1)     block-diag fused weights + bias col
        # o_ref: (B*C_out, HW)
        xr = jnp.maximum(x_ref[...], 0.0)        # ReLU first (f32, VPU)
        m = m_ref[...]

        rows = []
        for k in range(KH * KW):
            dh = k // KW - PAD
            dw = k % KW - PAD
            off = dh * W + dw
            if off == 0:
                rows.append(xr)                  # centre tap: no shift, no mask
            else:
                # shifted[:, p] == xr[:, (p + off) % HW]; the mask zeroes every
                # position whose source falls outside the image (zero-padding
                # semantics).  Since any cross-batch wrap of the folded lane axis
                # only happens when the source crosses an image edge, the same
                # mask also kills all cross-batch contamination.
                shifted = pltpu.roll(xr, shift=(-off) % HW, axis=1)
                rows.append(shifted * m[k:k + 1, :])
        rows.append(jnp.ones((1, HW), dtype=jnp.float32))   # bias "tap"

        # B*C_in == 8 fills the sublanes exactly, so each tap sits at an 8-aligned
        # sublane offset: this concat is pure vreg placement.
        s = jnp.concatenate(rows, axis=0)        # (KH*KW*B*C_in + 1, HW)

        # Single fused MXU matmul; the bias comes out of the ones-row column.
        out = jnp.dot(w_ref[...], s, preferred_element_type=jnp.float32)
        o_ref[...] = out.astype(o_ref.dtype)

    return kernel


def _round_up(n, m):
    return ((n + m - 1) // m) * m


@jax.jit
def normal_relu_conv(x_nchw, weight, bias):
    """Forward pass of Normal_Relu_Conv (bn=False, RELU_FIRST=True).

    x_nchw: (B, C_in, H, W) float32
    weight: (C_out, C_in, KH, KW) float32   (PyTorch Conv2d OIHW layout)
    bias:   (C_out,) float32
    returns (B, C_out, H, W) float32 (NCHW, like the PyTorch module).
    """
    B, C_in, H, W = x_nchw.shape
    C_out = weight.shape[0]
    HW = H * W
    K = KH * KW * B * C_in + 1          # fused contraction length (+1 = bias row)

    # ---- host-side constant plumbing (tiny; x itself is only reshaped) --------
    # Free contiguous reshape: (B, C_in, H, W) -> (B*C_in, HW). No pad / transpose.
    x_flat = x_nchw.reshape(B * C_in, HW)

    # Halo masks, one row per (kh, kw) tap, computed once outside the kernel.
    pos = jnp.arange(HW, dtype=jnp.int32)
    hh = pos // W
    ww = pos % W
    mask_rows = []
    for kh in range(KH):
        for kw in range(KW):
            dh, dw = kh - PAD, kw - PAD
            ok = (hh + dh >= 0) & (hh + dh < H) & (ww + dw >= 0) & (ww + dw < W)
            mask_rows.append(ok)
    masks = jnp.stack(mask_rows).astype(x_nchw.dtype)            # (9, HW)

    # Block-diagonal fused weight:
    #   row b*C_out+co, col k*(B*C_in) + b*C_in + ci  ->  weight[co, ci, kh, kw]
    #   last column (hit by the ones row)             ->  bias[co]
    wf3 = jnp.transpose(weight, (0, 2, 3, 1)).reshape(C_out, KH * KW, C_in)
    w_block = jnp.einsum('ab,okc->aokbc', jnp.eye(B, dtype=weight.dtype), wf3)
    w_block = w_block.reshape(B * C_out, KH * KW * B * C_in)
    bias_col = jnp.tile(bias, (B,)).reshape(B * C_out, 1)
    w_fused = jnp.concatenate([w_block, bias_col], axis=1)       # (B*C_out, K)

    # ---- honest VMEM budget from the real padded (8,128) tiles ---------------
    def tile_bytes(r, c):
        return _round_up(r, 8) * _round_up(c, 128) * 4
    block_bytes = (tile_bytes(B * C_in, HW) + tile_bytes(KH * KW, HW)
                   + tile_bytes(B * C_out, K) + tile_bytes(B * C_out, HW))
    scratch_bytes = (KH * KW + 1) * tile_bytes(B * C_in, HW) + tile_bytes(K, HW)
    vmem_limit = int(max(4 * 2**20, 2 * block_bytes + scratch_bytes + (1 << 20)))

    out_flat = pl.pallas_call(
        _make_kernel(B, C_in, H, W),
        out_shape=jax.ShapeDtypeStruct((B * C_out, HW), x_nchw.dtype),
        grid_spec=pltpu.PrefetchScalarGridSpec(
            num_scalar_prefetch=0,
            grid=(1,),                                    # single step: batch folded
            in_specs=[
                pl.BlockSpec((B * C_in, HW), lambda i: (0, 0)),
                pl.BlockSpec((KH * KW, HW), lambda i: (0, 0)),
                pl.BlockSpec((B * C_out, K), lambda i: (0, 0)),
            ],
            out_specs=pl.BlockSpec((B * C_out, HW), lambda i: (0, 0)),
        ),
        compiler_params=pltpu.CompilerParams(
            dimension_semantics=("arbitrary",),
            vmem_limit_bytes=vmem_limit,
        ),
    )(x_flat, masks, w_fused)

    # Free contiguous reshape back to NCHW: rows are ordered (b major, c_out minor).
    return out_flat.reshape(B, C_out, H, W)


if __name__ == "__main__":
    key = jax.random.PRNGKey(0)
    k_x, k_w, k_b = jax.random.split(key, 3)

    B, C, H, W = 2, 4, 16, 16   # module uses Conv2d(C_in, C_in): C_out == C_in == C

    x = jax.random.normal(k_x, (B, C, H, W), dtype=jnp.float32)
    # Deterministic parameter init (kaiming-uniform-ish bounds like nn.Conv2d default).
    fan_in = C * KH * KW
    bound = 1.0 / (fan_in ** 0.5)
    weight = jax.random.uniform(k_w, (C, C, KH, KW), jnp.float32, -bound, bound)
    bias = jax.random.uniform(k_b, (C,), jnp.float32, -bound, bound)

    y = normal_relu_conv(x, weight, bias)
    y = jax.block_until_ready(y)

    # Reference: ReLU first, then XLA conv2d same-padding + bias.
    x_relu = jnp.maximum(x, 0.0)
    y_ref = jax.lax.conv_general_dilated(
        x_relu, weight, window_strides=(1, 1),
        padding=((PAD, PAD), (PAD, PAD)),
        dimension_numbers=("NCHW", "OIHW", "NCHW"))
    y_ref = y_ref + bias.reshape(1, C, 1, 1)

    assert y.shape == (B, C, H, W)
    assert jnp.allclose(y, y_ref, atol=1e-4, rtol=1e-4)
    print("KERNEL_OK")
</pallas_src>

<mosaic_0001>
module attributes {stable_mosaic.version = 11 : i64} {
  func.func @kernel(%arg0: i32, %arg1: memref<8x256xf32, #tpu.memory_space<vmem>>, %arg2: memref<9x256xf32, #tpu.memory_space<vmem>>, %arg3: memref<8x73xf32, #tpu.memory_space<vmem>>, %arg4: memref<8x256xf32, #tpu.memory_space<vmem>>) attributes {dimension_semantics = [#tpu.dimension_semantics<arbitrary>], iteration_bounds = array<i64: 1>, scalar_prefetch = 0 : i64, scratch_operands = 0 : i64, tpu.core_type = #tpu.core_type<tc>, window_params = [{pipeline_mode = #tpu.pipeline_mode<synchronous>, transform_indices = @transform_0, window_bounds = array<i64: 8, 256>}, {pipeline_mode = #tpu.pipeline_mode<synchronous>, transform_indices = @transform_1, window_bounds = array<i64: 9, 256>}, {pipeline_mode = #tpu.pipeline_mode<synchronous>, transform_indices = @transform_2, window_bounds = array<i64: 8, 73>}, {pipeline_mode = #tpu.pipeline_mode<synchronous>, transform_indices = @transform_3, window_bounds = array<i64: 8, 256>}]} {
    %c0 = arith.constant 0 : index
    %c0_0 = arith.constant 0 : index
    %0 = vector.load %arg1[%c0, %c0_0] : memref<8x256xf32, #tpu.memory_space<vmem>>, vector<8x256xf32>
    %cst = arith.constant 0.000000e+00 : f32
    %1 = vector.broadcast %cst : f32 to vector<8x256xf32>
    %2 = arith.maximumf %0, %1 : vector<8x256xf32>
    %c0_1 = arith.constant 0 : index
    %c0_2 = arith.constant 0 : index
    %3 = vector.load %arg2[%c0_1, %c0_2] : memref<9x256xf32, #tpu.memory_space<vmem>>, vector<9x256xf32>
    %c17_i32 = arith.constant 17 : i32
    %4 = tpu.dynamic_rotate %2 by %c17_i32 dim 1 : vector<8x256xf32>, i32 -> vector<8x256xf32>
    %5 = vector.extract_strided_slice %3 {offsets = [0, 0], sizes = [1, 256], strides = [1, 1]} : vector<9x256xf32> to vector<1x256xf32>
    %6 = vector.broadcast %5 : vector<1x256xf32> to vector<8x256xf32>
    %7 = arith.mulf %4, %6 : vector<8x256xf32>
    %c16_i32 = arith.constant 16 : i32
    %8 = tpu.dynamic_rotate %2 by %c16_i32 dim 1 : vector<8x256xf32>, i32 -> vector<8x256xf32>
    %9 = vector.extract_strided_slice %3 {offsets = [1, 0], sizes = [1, 256], strides = [1, 1]} : vector<9x256xf32> to vector<1x256xf32>
    %10 = vector.broadcast %9 : vector<1x256xf32> to vector<8x256xf32>
    %11 = arith.mulf %8, %10 : vector<8x256xf32>
    %c15_i32 = arith.constant 15 : i32
    %12 = tpu.dynamic_rotate %2 by %c15_i32 dim 1 : vector<8x256xf32>, i32 -> vector<8x256xf32>
    %13 = vector.extract_strided_slice %3 {offsets = [2, 0], sizes = [1, 256], strides = [1, 1]} : vector<9x256xf32> to vector<1x256xf32>
    %14 = vector.broadcast %13 : vector<1x256xf32> to vector<8x256xf32>
    %15 = arith.mulf %12, %14 : vector<8x256xf32>
    %c1_i32 = arith.constant 1 : i32
    %16 = tpu.dynamic_rotate %2 by %c1_i32 dim 1 : vector<8x256xf32>, i32 -> vector<8x256xf32>
    %17 = vector.extract_strided_slice %3 {offsets = [3, 0], sizes = [1, 256], strides = [1, 1]} : vector<9x256xf32> to vector<1x256xf32>
    %18 = vector.broadcast %17 : vector<1x256xf32> to vector<8x256xf32>
    %19 = arith.mulf %16, %18 : vector<8x256xf32>
    %c255_i32 = arith.constant 255 : i32
    %20 = tpu.dynamic_rotate %2 by %c255_i32 dim 1 : vector<8x256xf32>, i32 -> vector<8x256xf32>
    %21 = vector.extract_strided_slice %3 {offsets = [5, 0], sizes = [1, 256], strides = [1, 1]} : vector<9x256xf32> to vector<1x256xf32>
    %22 = vector.broadcast %21 : vector<1x256xf32> to vector<8x256xf32>
    %23 = arith.mulf %20, %22 : vector<8x256xf32>
    %c241_i32 = arith.constant 241 : i32
    %24 = tpu.dynamic_rotate %2 by %c241_i32 dim 1 : vector<8x256xf32>, i32 -> vector<8x256xf32>
    %25 = vector.extract_strided_slice %3 {offsets = [6, 0], sizes = [1, 256], strides = [1, 1]} : vector<9x256xf32> to vector<1x256xf32>
    %26 = vector.broadcast %25 : vector<1x256xf32> to vector<8x256xf32>
    %27 = arith.mulf %24, %26 : vector<8x256xf32>
    %c240_i32 = arith.constant 240 : i32
    %28 = tpu.dynamic_rotate %2 by %c240_i32 dim 1 : vector<8x256xf32>, i32 -> vector<8x256xf32>
    %29 = vector.extract_strided_slice %3 {offsets = [7, 0], sizes = [1, 256], strides = [1, 1]} : vector<9x256xf32> to vector<1x256xf32>
    %30 = vector.broadcast %29 : vector<1x256xf32> to vector<8x256xf32>
    %31 = arith.mulf %28, %30 : vector<8x256xf32>
    %c239_i32 = arith.constant 239 : i32
    %32 = tpu.dynamic_rotate %2 by %c239_i32 dim 1 : vector<8x256xf32>, i32 -> vector<8x256xf32>
    %33 = vector.extract_strided_slice %3 {offsets = [8, 0], sizes = [1, 256], strides = [1, 1]} : vector<9x256xf32> to vector<1x256xf32>
    %34 = vector.broadcast %33 : vector<1x256xf32> to vector<8x256xf32>
    %35 = arith.mulf %32, %34 : vector<8x256xf32>
    %cst_3 = arith.constant 1.000000e+00 : f32
    %36 = vector.broadcast %cst_3 : f32 to vector<1x256xf32>
    %37 = tpu.concatenate %7, %11, %15, %19, %2, %23, %27, %31, %35, %36 in 0 : vector<8x256xf32>, vector<8x256xf32>, vector<8x256xf32>, vector<8x256xf32>, vector<8x256xf32>, vector<8x256xf32>, vector<8x256xf32>, vector<8x256xf32>, vector<8x256xf32>, vector<1x256xf32> -> vector<73x256xf32>
    %c0_4 = arith.constant 0 : index
    %c0_5 = arith.constant 0 : index
    %38 = vector.load %arg3[%c0_4, %c0_5] : memref<8x73xf32, #tpu.memory_space<vmem>>, vector<8x73xf32>
    %cst_6 = arith.constant dense<0.000000e+00> : vector<8x256xf32>
    %39 = tpu.matmul %38, %37, %cst_6 {dimension_numbers = #tpu.dot_dimension_numbers<[1], [0], [0], [1], [0, 0, 1, 1], [], []>} : vector<8x73xf32>, vector<73x256xf32>, vector<8x256xf32> -> vector<8x256xf32>
    %c0_7 = arith.constant 0 : index
    %c0_8 = arith.constant 0 : index
    %40 = vector.load %arg4[%c0_7, %c0_8] : memref<8x256xf32, #tpu.memory_space<vmem>>, vector<8x256xf32>
    tpu.vector_store %arg4[%c0_7, %c0_8], %39 {strides = array<i32>} : memref<8x256xf32, #tpu.memory_space<vmem>>, vector<8x256xf32>,
    return
  }
  func.func @transform_0(%arg0: i32) -> (i32, i32) {
    %c0_i32 = arith.constant 0 : i32
    %c0_i32_0 = arith.constant 0 : i32
    %c0_i32_1 = arith.constant 0 : i32
    return %c0_i32, %c0_i32_0 : i32, i32
  }
  func.func @transform_1(%arg0: i32) -> (i32, i32) {
    %c0_i32 = arith.constant 0 : i32
    %c0_i32_0 = arith.constant 0 : i32
    %c0_i32_1 = arith.constant 0 : i32
    return %c0_i32, %c0_i32_0 : i32, i32
  }
  func.func @transform_2(%arg0: i32) -> (i32, i32) {
    %c0_i32 = arith.constant 0 : i32
    %c0_i32_0 = arith.constant 0 : i32
    %c0_i32_1 = arith.constant 0 : i32
    return %c0_i32, %c0_i32_0 : i32, i32
  }
  func.func @transform_3(%arg0: i32) -> (i32, i32) {
    %c0_i32 = arith.constant 0 : i32
    %c0_i32_0 = arith.constant 0 : i32
    %c0_i32_1 = arith.constant 0 : i32
    return %c0_i32, %c0_i32_0 : i32, i32
  }
}

</mosaic_0001>

<llo_original>
// kernel: tile.8
$region0: #{tile.8}
  #allocation0 [shape = 's32[1]{0}', space=sflag, size = 0x4, scoped, tag = 'scoped memory for tile.8']
  %s0 = inlined_call_operand.vmem [shape: f32[4], index: 0, kind: input, shape index: {}]
  %s1 = inlined_call_operand.vmem [shape: f32[2,4], index: 1, kind: output, shape index: {}]
  // Predicated region
  $region2: #{tile.8} parent=0 // pred_check
    _
  $region3: #{tile.8} parent=0 // pred_check_branch
    %3 = sbr.rel (0) target = $region5
  $region4: #{tile.8} parent=0 // pred_region
    _
  $region5: #{tile.8} parent=0 // pred_fallthru
    _
  %v4 = vld [vmem:[%s0] ss:$0 sm:$0xff]
  %5 = vst [vmem:[%s1] sm:$0x3] %v4

// kernel: tile.0
$region0: #{tile.0}
  %s0 = inlined_call_operand.vmem [shape: f32[2,4], index: 0, kind: input, shape index: {}]
  %s1 = inlined_call_operand.vmem [shape: f32[8,1], index: 1, kind: output, shape index: {}]
  $region1: #{tile.0} parent=0
    #allocation0 [shape = 'u8[4096]{0}', space=vmem, size = 0x1000, scoped, tag = 'scoped mem for input reshape']
    %s3 = sshllo.u32 0, 2
    %v4 = vld [vmem:[%s0] sm:%s3]
    %5 = vst [vmem:[#allocation0] sm:%s3] %v4
    %v6 = vld [vmem:[#allocation0] sm:$0x3]
    %vm7 = vcmask 7168
    %8 = vst.msk [vmem:[%s1] ss:$4 sm:$0x3] %vm7, %v6
    %v9 = vld [vmem:[#allocation0] sm:$0x3]
    %10 = vrot.lane.b32.xlu0 %v9, 127
    %v11 = vpop.permute.xlu0 %10
    %vm12 = vcmask 7168
    %s13 = scalar_lea.vmem %s1, 1
    %14 = vst.msk [vmem:[%s13] ss:$4 sm:$0x3] %vm12, %v11
    %v15 = vld [vmem:[#allocation0] sm:$0x3]
    %16 = vrot.lane.b32.xlu0 %v15, 126
    %v17 = vpop.permute.xlu0 %16
    %vm18 = vcmask 7168
    %s19 = scalar_lea.vmem %s1, 2
    %20 = vst.msk [vmem:[%s19] ss:$4 sm:$0x3] %vm18, %v17
    %v21 = vld [vmem:[#allocation0] sm:$0x3]
    %22 = vrot.lane.b32.xlu0 %v21, 125
    %v23 = vpop.permute.xlu0 %22
    %vm24 = vcmask 7168
    %s25 = scalar_lea.vmem %s1, 3
    %26 = vst.msk [vmem:[%s25] ss:$4 sm:$0x3] %vm24, %v23

// kernel: normal_relu_conv.1
$region0: #{normal_relu_conv.1}
  #allocation0 [shape = 'u32[]', space=smem, size = 0x4, offset = 0x4, fixed_abs, tag = 'smem constant byte address 0x4 - core index']
  #allocation1 [shape = 'u32[144,128]{1,0:T(1,128)}', space=vmem, size = 0x12000, scoped, tag = 'internal scratch']
  %s0 = inlined_call_operand.vmem [shape: f32[8,256], index: 0, kind: input, shape index: {}]
  %s1 = inlined_call_operand.vmem [shape: f32[9,256], index: 1, kind: input, shape index: {}]
  %s2 = inlined_call_operand.vmem [shape: f32[8,73], index: 2, kind: input, shape index: {}]
  %s3 = inlined_call_operand.vmem [shape: f32[8,256], index: 3, kind: output, shape index: {}]
  %s4 = sld [smem:[#allocation0]]
  $region22: #{normal_relu_conv.1} parent=0
    _
  %s6 = ssub.s32 1, %s4
  %s7 = scalar_select 0, %s6, %s4
  // Predicated region
  $region2: #{normal_relu_conv.1} parent=0 // pred_check
    _
  $region3: #{normal_relu_conv.1} parent=0 // pred_check_branch
    %9 = sbr.rel (0) target = $region5
  $region4: #{normal_relu_conv.1} parent=0 // pred_region
    _
  $region5: #{normal_relu_conv.1} parent=0 // pred_fallthru
    _
  // Predicated region
  $region6: #{normal_relu_conv.1} parent=0 // pred_check
    _
  $region7: #{normal_relu_conv.1} parent=0 // pred_check_branch
    %11 = sbr.rel (0) target = $region9
  $region8: #{normal_relu_conv.1} parent=0 // pred_region
    _
  $region9: #{normal_relu_conv.1} parent=0 // pred_fallthru
    _
  // Predicated region
  $region10: #{normal_relu_conv.1} parent=0 // pred_check
    _
  $region11: #{normal_relu_conv.1} parent=0 // pred_check_branch
    %13 = sbr.rel (0) target = $region13
  $region12: #{normal_relu_conv.1} parent=0 // pred_region
    _
  $region13: #{normal_relu_conv.1} parent=0 // pred_fallthru
    _
  %v14 = vld [vmem:[%s0] sm:$0xff]
  %v15 = vld [vmem:[%s0 + $0x8] sm:$0xff]
  %v16 = vmax.f32 %v14, 0.0
  %v17 = vmax.f32 %v15, 0.0
  %v18 = vld [vmem:[%s1] sm:$0xff]
  %v19 = vld [vmem:[%s1 + $0x8] sm:$0xff]
  %v20 = vld [vmem:[%s1 + $0x10] sm:$0x1]
  %v21 = vld [vmem:[%s1 + $0x18] sm:$0x1]
  %22 = vrot.lane.b32.xlu0 %v16, 17
  %v23 = vpop.permute.xlu0 %22
  %24 = vrot.lane.b32.xlu0 %v17, 17
  %v25 = vpop.permute.xlu0 %24
  %v26 = vlaneseq
  %v27 = vand.u32 %v26, 127
  %vm28 = vcmp.lt.s32.totalorder %v27, 17
  %v29 = vsel %vm28, %v23, %v25
  %v30 = vsel %vm28, %v25, %v23
  %v31 = vlaneseq
  %v32 = vshrl.u32 %v31, 7
  %v33 = vsub.s32 0, %v32
  %v34 = vrot.slane %v18, %v33
  %v35 = vlaneseq
  %v36 = vshrl.u32 %v35, 7
  %v37 = vsub.s32 0, %v36
  %v38 = vrot.slane %v19, %v37
  %v39 = vmul.f32 %v30, %v34
  %v40 = vmul.f32 %v29, %v38
  %41 = vrot.lane.b32.xlu0 %v16, 16
  %v42 = vpop.permute.xlu0 %41
  %43 = vrot.lane.b32.xlu0 %v17, 16
  %v44 = vpop.permute.xlu0 %43
  %vm45 = vcmp.lt.s32.totalorder %v27, 16
  %v46 = vsel %vm45, %v42, %v44
  %v47 = vsel %vm45, %v44, %v42
  %v48 = vlaneseq
  %v49 = vshrl.u32 %v48, 7
  %v50 = vsub.s32 1, %v49
  %v51 = vrot.slane %v18, %v50
  %v52 = vlaneseq
  %v53 = vshrl.u32 %v52, 7
  %v54 = vsub.s32 1, %v53
  %v55 = vrot.slane %v19, %v54
  %v56 = vmul.f32 %v47, %v51
  %v57 = vmul.f32 %v46, %v55
  %58 = vrot.lane.b32.xlu0 %v16, 15
  %v59 = vpop.permute.xlu0 %58
  %60 = vrot.lane.b32.xlu0 %v17, 15
  %v61 = vpop.permute.xlu0 %60
  %vm62 = vcmp.lt.s32.totalorder %v27, 15
  %v63 = vsel %vm62, %v59, %v61
  %v64 = vsel %vm62, %v61, %v59
  %v65 = vlaneseq
  %v66 = vshrl.u32 %v65, 7
  %v67 = vsub.s32 2, %v66
  %v68 = vrot.slane %v18, %v67
  %v69 = vlaneseq
  %v70 = vshrl.u32 %v69, 7
  %v71 = vsub.s32 2, %v70
  %v72 = vrot.slane %v19, %v71
  %v73 = vmul.f32 %v64, %v68
  %v74 = vmul.f32 %v63, %v72
  %75 = vrot.lane.b32.xlu0 %v16, 1
  %v76 = vpop.permute.xlu0 %75
  %77 = vrot.lane.b32.xlu0 %v17, 1
  %v78 = vpop.permute.xlu0 %77
  %vm79 = vcmp.lt.s32.totalorder %v27, 1
  %v80 = vsel %vm79, %v76, %v78
  %v81 = vsel %vm79, %v78, %v76
  %v82 = vlaneseq
  %v83 = vshrl.u32 %v82, 7
  %v84 = vsub.s32 3, %v83
  %v85 = vrot.slane %v18, %v84
  %v86 = vlaneseq
  %v87 = vshrl.u32 %v86, 7
  %v88 = vsub.s32 3, %v87
  %v89 = vrot.slane %v19, %v88
  %v90 = vmul.f32 %v81, %v85
  %v91 = vmul.f32 %v80, %v89
  %92 = vrot.lane.b32.xlu0 %v16, 127
  %v93 = vpop.permute.xlu0 %92
  %94 = vrot.lane.b32.xlu0 %v17, 127
  %v95 = vpop.permute.xlu0 %94
  %vm96 = vcmp.lt.s32.totalorder %v27, 127
  %v97 = vsel %vm96, %v93, %v95
  %v98 = vsel %vm96, %v95, %v93
  %v99 = vlaneseq
  %v100 = vshrl.u32 %v99, 7
  %v101 = vsub.s32 5, %v100
  %v102 = vrot.slane %v18, %v101
  %v103 = vlaneseq
  %v104 = vshrl.u32 %v103, 7
  %v105 = vsub.s32 5, %v104
  %v106 = vrot.slane %v19, %v105
  %v107 = vmul.f32 %v97, %v102
  %v108 = vmul.f32 %v98, %v106
  %109 = vrot.lane.b32.xlu0 %v16, 113
  %v110 = vpop.permute.xlu0 %109
  %111 = vrot.lane.b32.xlu0 %v17, 113
  %v112 = vpop.permute.xlu0 %111
  %vm113 = vcmp.lt.s32.totalorder %v27, 113
  %v114 = vsel %vm113, %v110, %v112
  %v115 = vsel %vm113, %v112, %v110
  %v116 = vlaneseq
  %v117 = vshrl.u32 %v116, 7
  %v118 = vsub.s32 6, %v117
  %v119 = vrot.slane %v18, %v118
  %v120 = vlaneseq
  %v121 = vshrl.u32 %v120, 7
  %v122 = vsub.s32 6, %v121
  %v123 = vrot.slane %v19, %v122
  %v124 = vmul.f32 %v114, %v119
  %v125 = vmul.f32 %v115, %v123
  %126 = vrot.lane.b32.xlu0 %v16, 112
  %v127 = vpop.permute.xlu0 %126
  %128 = vrot.lane.b32.xlu0 %v17, 112
  %v129 = vpop.permute.xlu0 %128
  %vm130 = vcmp.lt.s32.totalorder %v27, 112
  %v131 = vsel %vm130, %v127, %v129
  %v132 = vsel %vm130, %v129, %v127
  %v133 = vlaneseq
  %v134 = vshrl.u32 %v133, 7
  %v135 = vsub.s32 7, %v134
  %v136 = vrot.slane %v18, %v135
  %v137 = vlaneseq
  %v138 = vshrl.u32 %v137, 7
  %v139 = vsub.s32 7, %v138
  %v140 = vrot.slane %v19, %v139
  %v141 = vmul.f32 %v131, %v136
  %v142 = vmul.f32 %v132, %v140
  %143 = vrot.lane.b32.xlu0 %v16, 111
  %v144 = vpop.permute.xlu0 %143
  %145 = vrot.lane.b32.xlu0 %v17, 111
  %v146 = vpop.permute.xlu0 %145
  %vm147 = vcmp.lt.s32.totalorder %v27, 111
  %v148 = vsel %vm147, %v144, %v146
  %v149 = vsel %vm147, %v146, %v144
  %v150 = vlaneseq
  %v151 = vshrl.u32 %v150, 7
  %v152 = vsub.s32 0, %v151
  %v153 = vrot.slane %v20, %v152
  %v154 = vlaneseq
  %v155 = vshrl.u32 %v154, 7
  %v156 = vsub.s32 0, %v155
  %v157 = vrot.slane %v21, %v156
  %v158 = vmul.f32 %v148, %v153
  %v159 = vmul.f32 %v149, %v157
  %v160 = vld [vmem:[%s2] sm:$0xff]
  %vm161 = vcmask 596992
  %v163 = vsel %vm161, %v160, 0
  %vm165 = vcmask 1040384
  %v167 = vsel %vm165, 1.0, 0
  %169 = vmatprep.subr.mxu0 %v40
  %170 = vmatpush1.msra.mxu0 %v39
  %171 = vmatprep.subr.mxu0 %v57
  %172 = vmatpush1.msra.mxu0 %v56
  %173 = vmatprep.subr.mxu0 %v74
  %174 = vmatpush1.msra.mxu0 %v73
  %175 = vmatprep.subr.mxu0 %v91
  %176 = vmatpush1.msra.mxu0 %v90
  %177 = vmatprep.subr.mxu0 %v17
  %178 = vmatpush1.msra.mxu0 %v16
  %179 = vmatprep.subr.mxu0 %v108
  %180 = vmatpush1.msra.mxu0 %v107
  %181 = vmatprep.subr.mxu0 %v125
  %182 = vmatpush1.msra.mxu0 %v124
  %183 = vmatprep.subr.mxu0 %v142
  %184 = vmatpush1.msra.mxu0 %v141
  %185 = vmatprep.subr.mxu0 %v159
  %186 = vmatpush1.msra.mxu0 %v158
  %187 = vmatprep.subr.mxu0 %v167
  %188 = vmatpush1.msra.mxu0 %v167
  %189 = vmatprep.subr.mxu0 0.0
  %190 = vmatpush1.msra.mxu0 0.0
  %191 = vmatprep.subr.mxu0 0.0
  %192 = vmatpush1.msra.mxu0 0.0
  %193 = vmatprep.subr.mxu0 0.0
  %194 = vmatpush1.msra.mxu0 0.0
  %195 = vmatprep.subr.mxu0 0.0
  %196 = vmatpush1.msra.mxu0 0.0
  %197 = vmatprep.subr.mxu0 0.0
  %198 = vmatpush1.msra.mxu0 0.0
  %199 = vmatprep.subr.mxu0 0.0
  %200 = vmatpush1.msra.mxu0 0.0
  %201 = vmatprep.subr.mxu0 0.0
  %202 = vmatpush1.msra.mxu0 0.0
  %203 = vmatprep.subr.mxu0 0.0
  %204 = vmatpush1.msra.mxu0 0.0
  %205 = vmatprep.subr.mxu0 0.0
  %206 = vmatpush1.msra.mxu0 0.0
  %207 = vmatprep.subr.mxu0 0.0
  %208 = vmatpush1.msra.mxu0 0.0
  %209 = vmatprep.subr.mxu0 0.0
  %210 = vmatpush1.msra.mxu0 0.0
  %211 = vmatprep.subr.mxu0 0.0
  %212 = vmatpush1.msra.mxu0 0.0
  %213 = vmatprep.subr.mxu0 0.0
  %214 = vmatpush1.msra.mxu0 0.0
  %215 = vmatprep.subr.mxu0 0.0
  %216 = vmatpush1.msra.mxu0 0.0
  %217 = vmatprep.subr.mxu0 0.0
  %218 = vmatpush1.msra.mxu0 0.0
  %219 = vmatprep.subr.mxu0 0.0
  %220 = vmatpush1.msra.mxu0 0.0
  %221 = vmatprep.subr.mxu0 0.0
  %222 = vmatpush1.msra.mxu0 0.0
  %223 = vmatprep.subr.mxu0 0.0
  %224 = vmatpush1.msra.mxu0 0.0
  %225 = vmatprep.subr.mxu0 0.0
  %226 = vmatpush1.msra.mxu0 0.0
  %227 = vmatprep.subr.mxu0 0.0
  %228 = vmatpush1.msra.mxu0 0.0
  %229 = vmatprep.subr.mxu0 0.0
  %230 = vmatpush1.msra.mxu0 0.0
  %231 = vmatprep.subr.mxu0 0.0
  %232 = vmatpush1.msra.mxu0 0.0
  %233 = vmatprep.mubr.f32.mxu0 0.0
  %234 = vmatmul.mubr.f32.gmra.mrb[0].mxu0 %v163
  %v235 = vpop.f32.mrb[0].mxu0
  %v236 = vadd.f32 0.0, %v235
  %v237 = vpop.f32.mrb[0].mxu0
  %v238 = vadd.f32 0.0, %v237
  %239 = vdwg.mxu0
  %240 = vst [vmem:[%s3] sm:$0xff] %v236
  %241 = vst [vmem:[%s3 + $0x8] sm:$0xff] %v238
  // Predicated region
  $region14: #{normal_relu_conv.1} parent=0 // pred_check
    _
  $region15: #{normal_relu_conv.1} parent=0 // pred_check_branch
    %243 = sbr.rel (0) target = $region17
  $region16: #{normal_relu_conv.1} parent=0 // pred_region
    _
  $region17: #{normal_relu_conv.1} parent=0 // pred_fallthru
    _
  // Predicated region
  $region18: #{normal_relu_conv.1} parent=0 // pred_check
    _
  $region19: #{normal_relu_conv.1} parent=0 // pred_check_branch
    %245 = sbr.rel (0) target = $region21
  $region20: #{normal_relu_conv.1} parent=0 // pred_region
    _
  $region21: #{normal_relu_conv.1} parent=0 // pred_fallthru
    _

</llo_original>
